<compile_context>
chip_gen: v6e
topology: v6e:2x2x1
jax: 0.10.0
libtpu: 0.0.40
codegen_flags: <defaults>
</compile_context>

<pallas_src>
import functools

import jax
import jax.numpy as jnp
from jax import lax
from jax.experimental import pallas as pl
from jax.experimental.pallas import tpu as pltpu


def _edge_conv_flat(d, img_h):
    """EdgeConv (3x3, center=8, neighbours=-1, zero padding) on a flat (TB*H, W) slab.

    out = 9*d - box3x3(d); the 3x3 box sum is computed separably (lanes, then sublanes).
    Row masks use row % img_h so images stacked along the sublane axis stay independent.
    pltpu.roll follows jnp.roll semantics: roll(x, 1, axis)[i] == x[i-1].
    """
    rows, w = d.shape
    row = lax.broadcasted_iota(jnp.int32, (rows, w), 0) % img_h   # row index within each image
    col = lax.broadcasted_iota(jnp.int32, (rows, w), 1)

    # box along lanes (W): d[i, j-1] + d[i, j] + d[i, j+1], zero padding at column borders
    left = jnp.where(col > 0, pltpu.roll(d, shift=1, axis=1), 0.0)              # d[i, j-1]
    right = jnp.where(col < w - 1, pltpu.roll(d, shift=w - 1, axis=1), 0.0)     # d[i, j+1]
    rs = d + left + right

    # box along sublanes (H): rs[i-1, j] + rs[i, j] + rs[i+1, j], zero at per-image row borders
    up = jnp.where(row > 0, pltpu.roll(rs, shift=1, axis=0), 0.0)               # rs[i-1, j]
    down = jnp.where(row < img_h - 1, pltpu.roll(rs, shift=rows - 1, axis=0), 0.0)  # rs[i+1, j]
    box = rs + up + down

    return 9.0 * d - box


def _bce_bd_kernel(p_ref, t_ref, bce_out_ref, sq_out_ref, bce_acc, sq_acc, *, img_h):
    b = pl.program_id(1)
    nb = pl.num_programs(1)

    p = p_ref[...].astype(jnp.float32)   # (TB*H, W)
    t = t_ref[...].astype(jnp.float32)

    # ---- BCE map (PyTorch BCELoss clamps log terms at -100, avoiding 0 * -inf) ----
    log_p = jnp.maximum(jnp.log(p), -100.0)
    log_1mp = jnp.maximum(jnp.log(1.0 - p), -100.0)
    bce_map = -(t * log_p + (1.0 - t) * log_1mp)

    # ---- Boundary map: conv is linear -> EdgeConv(p) - EdgeConv(t) == EdgeConv(p - t) ----
    e = _edge_conv_flat(p - t, img_h)
    sq_map = e * e

    # ---- accumulate elementwise into VMEM scratch; reduce + store only on the last step ----
    @pl.when(b == 0)
    def _():
        bce_acc[...] = jnp.zeros_like(bce_acc)
        sq_acc[...] = jnp.zeros_like(sq_acc)

    bce_acc[...] += bce_map
    sq_acc[...] += sq_map

    @pl.when(b == nb - 1)
    def _():
        bce_out_ref[0] = jnp.sum(bce_acc[...], keepdims=True)
        sq_out_ref[0] = jnp.sum(sq_acc[...], keepdims=True)


def _pick_batch_tile(n, h, w, in_itemsize, budget_bytes):
    """Largest batch tile TB (divisor of N) with legal sublane count that fits the VMEM budget."""
    legal = [d for d in range(1, n + 1)
             if n % d == 0 and (d == n or (d * h) % 8 == 0)]
    # per-TB bytes: 2 inputs x 2 pipeline buffers x itemsize + 2 f32 scratch accumulators
    per_tb = h * w * (4 * in_itemsize + 2 * 4)
    within = [d for d in legal if d * per_tb <= budget_bytes]
    return max(within) if within else min(legal)


def bce_bd_loss(x, target, loss_weight=(1.0, 1.0)):
    """x: (N, 1, H, W) probabilities; target: (N, H, W). Returns scalar loss."""
    n, c, h, w = x.shape
    assert c == 1 and target.shape == (n, h, w)

    # Flat (N*H, W) views: contiguous reshapes (no extra HBM pass), original dtypes kept.
    p2 = x.reshape(n * h, w)
    t2 = target.reshape(n * h, w)

    # TODO(synk): a single image too large for VMEM (e.g. 4k x 4k f32) would need row tiling
    # with a +/-1 halo; not needed for typical segmentation-mask sizes.
    itemsize = max(x.dtype.itemsize, target.dtype.itemsize)
    tb = _pick_batch_tile(n, h, w, itemsize, budget_bytes=24 << 20)
    nb = n // tb

    # Split the batch across both TensorCores on v7x (harmless on single-TC v5e/v6e).
    split = 2 if (nb >= 2 and nb % 2 == 0) else 1
    nb_per = nb // split
    rows = tb * h

    img_spec = pl.BlockSpec((rows, w), lambda ci, bi: (ci * nb_per + bi, 0))
    out_spec = pl.BlockSpec((1, 1, 1), lambda ci, bi: (ci, 0, 0))

    bce_part, sq_part = pl.pallas_call(
        functools.partial(_bce_bd_kernel, img_h=h),
        out_shape=(jax.ShapeDtypeStruct((split, 1, 1), jnp.float32),
                   jax.ShapeDtypeStruct((split, 1, 1), jnp.float32)),
        grid_spec=pltpu.PrefetchScalarGridSpec(
            num_scalar_prefetch=0,
            grid=(split, nb_per),
            in_specs=[img_spec, img_spec],
            out_specs=[out_spec, out_spec],
            scratch_shapes=[pltpu.VMEM((rows, w), jnp.float32),
                            pltpu.VMEM((rows, w), jnp.float32)]),
        compiler_params=pltpu.CompilerParams(
            dimension_semantics=("parallel", "arbitrary"),
            vmem_limit_bytes=48 << 20),
    )(p2, t2)

    n_elems = jnp.float32(n * h * w)
    bce_mean = jnp.sum(bce_part) / n_elems   # nn.BCELoss default 'mean' reduction
    mse_mean = jnp.sum(sq_part) / n_elems    # F.mse_loss default 'mean' reduction
    return loss_weight[0] * bce_mean + loss_weight[1] * mse_mean


if __name__ == "__main__":
    key = jax.random.PRNGKey(0)
    k1, k2 = jax.random.split(key)

    N, H, W = 2, 16, 16
    # predictions in (0, 1) as BCELoss requires
    x = jax.nn.sigmoid(jax.random.normal(k1, (N, 1, H, W), dtype=jnp.float32))
    # binary target mask
    target = (jax.random.uniform(k2, (N, H, W)) > 0.5).astype(jnp.float32)

    loss_weight = (1.0, 0.5)   # deterministic stand-in for the module's loss_weight param

    loss = jax.jit(functools.partial(bce_bd_loss, loss_weight=loss_weight))(x, target)
    jax.block_until_ready(loss)
    print("KERNEL_OK")
</pallas_src>

<mosaic_0001>
module attributes {stable_mosaic.version = 11 : i64} {
  func.func @_bce_bd_kernel(%arg0: i32, %arg1: i32, %arg2: memref<32x16xf32, #tpu.memory_space<vmem>>, %arg3: memref<32x16xf32, #tpu.memory_space<vmem>>, %arg4: memref<1x1x1xf32, #tpu.memory_space<vmem>>, %arg5: memref<1x1x1xf32, #tpu.memory_space<vmem>>, %arg6: memref<32x16xf32, #tpu.memory_space<vmem>>, %arg7: memref<32x16xf32, #tpu.memory_space<vmem>>) attributes {dimension_semantics = [#tpu.dimension_semantics<parallel>, #tpu.dimension_semantics<arbitrary>], iteration_bounds = array<i64: 1, 1>, scalar_prefetch = 0 : i64, scratch_operands = 2 : i64, tpu.core_type = #tpu.core_type<tc>, window_params = [{transform_indices = @transform_0, window_bounds = array<i64: 32, 16>}, {transform_indices = @transform_1, window_bounds = array<i64: 32, 16>}, {transform_indices = @transform_2, window_bounds = array<i64: 1, 1, 1>}, {transform_indices = @transform_3, window_bounds = array<i64: 1, 1, 1>}]} {
    %c0 = arith.constant 0 : index
    %c0_0 = arith.constant 0 : index
    %0 = vector.load %arg2[%c0, %c0_0] : memref<32x16xf32, #tpu.memory_space<vmem>>, vector<32x16xf32>
    %c0_1 = arith.constant 0 : index
    %c0_2 = arith.constant 0 : index
    %1 = vector.load %arg3[%c0_1, %c0_2] : memref<32x16xf32, #tpu.memory_space<vmem>>, vector<32x16xf32>
    %2 = math.log %0 : vector<32x16xf32>
    %cst = arith.constant -1.000000e+02 : f32
    %3 = vector.broadcast %cst : f32 to vector<32x16xf32>
    %4 = arith.maximumf %2, %3 : vector<32x16xf32>
    %cst_3 = arith.constant 1.000000e+00 : f32
    %5 = vector.broadcast %cst_3 : f32 to vector<32x16xf32>
    %6 = arith.subf %5, %0 : vector<32x16xf32>
    %7 = math.log %6 : vector<32x16xf32>
    %cst_4 = arith.constant -1.000000e+02 : f32
    %8 = vector.broadcast %cst_4 : f32 to vector<32x16xf32>
    %9 = arith.maximumf %7, %8 : vector<32x16xf32>
    %10 = arith.mulf %1, %4 : vector<32x16xf32>
    %cst_5 = arith.constant 1.000000e+00 : f32
    %11 = vector.broadcast %cst_5 : f32 to vector<32x16xf32>
    %12 = arith.subf %11, %1 : vector<32x16xf32>
    %13 = arith.mulf %12, %9 : vector<32x16xf32>
    %14 = arith.addf %10, %13 : vector<32x16xf32>
    %cst_6 = arith.constant 0.000000e+00 : f32
    %15 = vector.broadcast %cst_6 : f32 to vector<32x16xf32>
    %16 = arith.subf %15, %14 : vector<32x16xf32>
    %17 = arith.subf %0, %1 : vector<32x16xf32>
    %18 = tpu.iota {dimensions = array<i32: 0>} : vector<32x16xi32>
    %c16_i32 = arith.constant 16 : i32
    %c0_i32 = arith.constant 0 : i32
    %19 = arith.cmpi eq, %c16_i32, %c0_i32 : i32
    %c1_i32 = arith.constant 1 : i32
    %20 = arith.select %19, %c1_i32, %c16_i32 : i32
    %21 = vector.broadcast %20 : i32 to vector<32x16xi32>
    %22 = arith.remsi %18, %21 : vector<32x16xi32>
    %c0_i32_7 = arith.constant 0 : i32
    %23 = vector.broadcast %c0_i32_7 : i32 to vector<32x16xi32>
    %24 = arith.cmpi ne, %22, %23 : vector<32x16xi32>
    %c0_i32_8 = arith.constant 0 : i32
    %25 = vector.broadcast %c0_i32_8 : i32 to vector<32x16xi32>
    %26 = arith.cmpi slt, %22, %25 : vector<32x16xi32>
    %c0_i32_9 = arith.constant 0 : i32
    %27 = arith.cmpi slt, %20, %c0_i32_9 : i32
    %28 = vector.broadcast %27 : i1 to vector<32x16xi1>
    %29 = vector.broadcast %28 : vector<32x16xi1> to vector<32x16xi1>
    %30 = arith.xori %26, %29 : vector<32x16xi1>
    %31 = arith.andi %30, %24 : vector<32x16xi1>
    %32 = vector.broadcast %20 : i32 to vector<32x16xi32>
    %33 = arith.addi %22, %32 : vector<32x16xi32>
    %34 = arith.select %31, %33, %22 : vector<32x16xi1>, vector<32x16xi32>
    %35 = tpu.iota {dimensions = array<i32: 1>} : vector<32x16xi32>
    %c0_i32_10 = arith.constant 0 : i32
    %36 = vector.broadcast %c0_i32_10 : i32 to vector<32x16xi32>
    %37 = arith.cmpi sgt, %35, %36 : vector<32x16xi32>
    %c1_i32_11 = arith.constant 1 : i32
    %38 = tpu.dynamic_rotate %17 by %c1_i32_11 dim 1 : vector<32x16xf32>, i32 -> vector<32x16xf32>
    %cst_12 = arith.constant 0.000000e+00 : f32
    %39 = vector.broadcast %cst_12 : f32 to vector<32x16xf32>
    %40 = arith.select %37, %38, %39 : vector<32x16xi1>, vector<32x16xf32>
    %c15_i32 = arith.constant 15 : i32
    %41 = vector.broadcast %c15_i32 : i32 to vector<32x16xi32>
    %42 = arith.cmpi slt, %35, %41 : vector<32x16xi32>
    %c15_i32_13 = arith.constant 15 : i32
    %43 = tpu.dynamic_rotate %17 by %c15_i32_13 dim 1 : vector<32x16xf32>, i32 -> vector<32x16xf32>
    %cst_14 = arith.constant 0.000000e+00 : f32
    %44 = vector.broadcast %cst_14 : f32 to vector<32x16xf32>
    %45 = arith.select %42, %43, %44 : vector<32x16xi1>, vector<32x16xf32>
    %46 = arith.addf %17, %40 : vector<32x16xf32>
    %47 = arith.addf %46, %45 : vector<32x16xf32>
    %c0_i32_15 = arith.constant 0 : i32
    %48 = vector.broadcast %c0_i32_15 : i32 to vector<32x16xi32>
    %49 = arith.cmpi sgt, %34, %48 : vector<32x16xi32>
    %c1_i32_16 = arith.constant 1 : i32
    %50 = tpu.dynamic_rotate %47 by %c1_i32_16 dim 0 : vector<32x16xf32>, i32 -> vector<32x16xf32>
    %cst_17 = arith.constant 0.000000e+00 : f32
    %51 = vector.broadcast %cst_17 : f32 to vector<32x16xf32>
    %52 = arith.select %49, %50, %51 : vector<32x16xi1>, vector<32x16xf32>
    %c15_i32_18 = arith.constant 15 : i32
    %53 = vector.broadcast %c15_i32_18 : i32 to vector<32x16xi32>
    %54 = arith.cmpi slt, %34, %53 : vector<32x16xi32>
    %c31_i32 = arith.constant 31 : i32
    %55 = tpu.dynamic_rotate %47 by %c31_i32 dim 0 : vector<32x16xf32>, i32 -> vector<32x16xf32>
    %cst_19 = arith.constant 0.000000e+00 : f32
    %56 = vector.broadcast %cst_19 : f32 to vector<32x16xf32>
    %57 = arith.select %54, %55, %56 : vector<32x16xi1>, vector<32x16xf32>
    %58 = arith.addf %47, %52 : vector<32x16xf32>
    %59 = arith.addf %58, %57 : vector<32x16xf32>
    %cst_20 = arith.constant 9.000000e+00 : f32
    %60 = vector.broadcast %cst_20 : f32 to vector<32x16xf32>
    %61 = arith.mulf %60, %17 : vector<32x16xf32>
    %62 = arith.subf %61, %59 : vector<32x16xf32>
    %63 = arith.mulf %62, %62 : vector<32x16xf32>
    %c0_i32_21 = arith.constant 0 : i32
    %64 = arith.cmpi eq, %arg1, %c0_i32_21 : i32
    %65 = arith.extui %64 : i1 to i32
    %c0_i32_22 = arith.constant 0 : i32
    %66 = arith.cmpi ne, %65, %c0_i32_22 : i32
    scf.if %66 {
      %cst_33 = arith.constant 0.000000e+00 : f32
      %76 = vector.broadcast %cst_33 : f32 to vector<32x16xf32>
      %c0_34 = arith.constant 0 : index
      %c0_35 = arith.constant 0 : index
      %77 = vector.load %arg6[%c0_34, %c0_35] : memref<32x16xf32, #tpu.memory_space<vmem>>, vector<32x16xf32>
      tpu.vector_store %arg6[%c0_34, %c0_35], %76 {strides = array<i32>} : memref<32x16xf32, #tpu.memory_space<vmem>>, vector<32x16xf32>,
      %cst_36 = arith.constant 0.000000e+00 : f32
      %78 = vector.broadcast %cst_36 : f32 to vector<32x16xf32>
      %c0_37 = arith.constant 0 : index
      %c0_38 = arith.constant 0 : index
      %79 = vector.load %arg7[%c0_37, %c0_38] : memref<32x16xf32, #tpu.memory_space<vmem>>, vector<32x16xf32>
      tpu.vector_store %arg7[%c0_37, %c0_38], %78 {strides = array<i32>} : memref<32x16xf32, #tpu.memory_space<vmem>>, vector<32x16xf32>,
    } else {
    }
    %c0_23 = arith.constant 0 : index
    %c0_24 = arith.constant 0 : index
    %67 = vector.load %arg6[%c0_23, %c0_24] : memref<32x16xf32, #tpu.memory_space<vmem>>, vector<32x16xf32>
    %68 = arith.addf %67, %16 : vector<32x16xf32>
    %c0_25 = arith.constant 0 : index
    %c0_26 = arith.constant 0 : index
    %69 = vector.load %arg6[%c0_25, %c0_26] : memref<32x16xf32, #tpu.memory_space<vmem>>, vector<32x16xf32>
    tpu.vector_store %arg6[%c0_25, %c0_26], %68 {strides = array<i32>} : memref<32x16xf32, #tpu.memory_space<vmem>>, vector<32x16xf32>,
    %c0_27 = arith.constant 0 : index
    %c0_28 = arith.constant 0 : index
    %70 = vector.load %arg7[%c0_27, %c0_28] : memref<32x16xf32, #tpu.memory_space<vmem>>, vector<32x16xf32>
    %71 = arith.addf %70, %63 : vector<32x16xf32>
    %c0_29 = arith.constant 0 : index
    %c0_30 = arith.constant 0 : index
    %72 = vector.load %arg7[%c0_29, %c0_30] : memref<32x16xf32, #tpu.memory_space<vmem>>, vector<32x16xf32>
    tpu.vector_store %arg7[%c0_29, %c0_30], %71 {strides = array<i32>} : memref<32x16xf32, #tpu.memory_space<vmem>>, vector<32x16xf32>,
    %c0_i32_31 = arith.constant 0 : i32
    %73 = arith.cmpi eq, %arg1, %c0_i32_31 : i32
    %74 = arith.extui %73 : i1 to i32
    %c0_i32_32 = arith.constant 0 : i32
    %75 = arith.cmpi ne, %74, %c0_i32_32 : i32
    scf.if %75 {
      %c0_33 = arith.constant 0 : index
      %c0_34 = arith.constant 0 : index
      %76 = vector.load %arg6[%c0_33, %c0_34] : memref<32x16xf32, #tpu.memory_space<vmem>>, vector<32x16xf32>
      %77 = vector.shape_cast %76 : vector<32x16xf32> to vector<1x32x16xf32>
      %cst_35 = arith.constant dense<0.000000e+00> : vector<1xf32>
      %78 = vector.multi_reduction <add>, %77, %cst_35 [1, 2] : vector<1x32x16xf32> to vector<1xf32>
      %79 = vector.shape_cast %78 : vector<1xf32> to vector<1x1x1xf32>
      %80 = vector.extract %79[0, 0, 0] : f32 from vector<1x1x1xf32>
      %81 = vector.broadcast %80 : f32 to vector<1x1xf32>
      %c0_36 = arith.constant 0 : index
      %c0_37 = arith.constant 0 : index
      %c0_38 = arith.constant 0 : index
      %82 = vector.load %arg4[%c0_36, %c0_37, %c0_38] : memref<1x1x1xf32, #tpu.memory_space<vmem>>, vector<1x1x1xf32>
      %83 = vector.shape_cast %82 : vector<1x1x1xf32> to vector<1x1xf32>
      %84 = vector.shape_cast %81 : vector<1x1xf32> to vector<1x1x1xf32>
      tpu.vector_store %arg4[%c0_36, %c0_37, %c0_38], %84 {strides = array<i32>} : memref<1x1x1xf32, #tpu.memory_space<vmem>>, vector<1x1x1xf32>,
      %c0_39 = arith.constant 0 : index
      %c0_40 = arith.constant 0 : index
      %85 = vector.load %arg7[%c0_39, %c0_40] : memref<32x16xf32, #tpu.memory_space<vmem>>, vector<32x16xf32>
      %86 = vector.shape_cast %85 : vector<32x16xf32> to vector<1x32x16xf32>
      %cst_41 = arith.constant dense<0.000000e+00> : vector<1xf32>
      %87 = vector.multi_reduction <add>, %86, %cst_41 [1, 2] : vector<1x32x16xf32> to vector<1xf32>
      %88 = vector.shape_cast %87 : vector<1xf32> to vector<1x1x1xf32>
      %89 = vector.extract %88[0, 0, 0] : f32 from vector<1x1x1xf32>
      %90 = vector.broadcast %89 : f32 to vector<1x1xf32>
      %c0_42 = arith.constant 0 : index
      %c0_43 = arith.constant 0 : index
      %c0_44 = arith.constant 0 : index
      %91 = vector.load %arg5[%c0_42, %c0_43, %c0_44] : memref<1x1x1xf32, #tpu.memory_space<vmem>>, vector<1x1x1xf32>
      %92 = vector.shape_cast %91 : vector<1x1x1xf32> to vector<1x1xf32>
      %93 = vector.shape_cast %90 : vector<1x1xf32> to vector<1x1x1xf32>
      tpu.vector_store %arg5[%c0_42, %c0_43, %c0_44], %93 {strides = array<i32>} : memref<1x1x1xf32, #tpu.memory_space<vmem>>, vector<1x1x1xf32>,
    } else {
    }
    return
  }
  func.func @transform_0(%arg0: i32, %arg1: i32) -> (i32, i32) {
    %c1_i32 = arith.constant 1 : i32
    %0 = arith.muli %arg0, %c1_i32 : i32
    %1 = arith.addi %0, %arg1 : i32
    %c0_i32 = arith.constant 0 : i32
    %c0_i32_0 = arith.constant 0 : i32
    return %1, %c0_i32 : i32, i32
  }
  func.func @transform_1(%arg0: i32, %arg1: i32) -> (i32, i32) {
    %c1_i32 = arith.constant 1 : i32
    %0 = arith.muli %arg0, %c1_i32 : i32
    %1 = arith.addi %0, %arg1 : i32
    %c0_i32 = arith.constant 0 : i32
    %c0_i32_0 = arith.constant 0 : i32
    return %1, %c0_i32 : i32, i32
  }
  func.func @transform_2(%arg0: i32, %arg1: i32) -> (i32, i32, i32) {
    %c0_i32 = arith.constant 0 : i32
    %c0_i32_0 = arith.constant 0 : i32
    %c0_i32_1 = arith.constant 0 : i32
    return %arg0, %c0_i32, %c0_i32_0 : i32, i32, i32
  }
  func.func @transform_3(%arg0: i32, %arg1: i32) -> (i32, i32, i32) {
    %c0_i32 = arith.constant 0 : i32
    %c0_i32_0 = arith.constant 0 : i32
    %c0_i32_1 = arith.constant 0 : i32
    return %arg0, %c0_i32, %c0_i32_0 : i32, i32, i32
  }
}

</mosaic_0001>

<llo_original>
// kernel: bce_bd_loss.1
$region0: #{bce_bd_loss.1}
  #allocation0 [shape = 'u32[]', space=smem, size = 0x4, offset = 0x4, fixed_abs, tag = 'smem constant byte address 0x4 - core index']
  #allocation1 [shape = 'u32[144,128]{1,0:T(1,128)}', space=vmem, size = 0x12000, scoped, tag = 'internal scratch']
  #allocation2 [shape = 'f32[32,16]{1,0:T(8,128)}', space=vmem, size = 0x4000, scoped, tag = 'scratch operand']
  #allocation3 [shape = 'f32[32,16]{1,0:T(8,128)}', space=vmem, size = 0x4000, scoped, tag = 'scratch operand']
  %s0 = inlined_call_operand.hbm [shape: f32[32,16], index: 0, kind: input, shape index: {}]
  %s1 = inlined_call_operand.hbm [shape: f32[32,16], index: 1, kind: input, shape index: {}]
  %s2 = inlined_call_operand.hbm [shape: f32[1,1,1], index: 2, kind: output, shape index: {0}]
  %s3 = inlined_call_operand.hbm [shape: f32[1,1,1], index: 3, kind: output, shape index: {1}]
  %4 = xla_tuple %s2, %s3
  %s5 = sld [smem:[#allocation0]]
  $region42: #{bce_bd_loss.1} parent=0
    _
  %s7 = ssub.s32 1, %s5
  %s8 = scalar_select 0, %s7, %s5
  $region1: #{bce_bd_loss.1} parent=0
    #allocation4 [shape = 'u8[16384]{0}', space=vmem, size = 0x4000, scoped, tag = 'input window, operand 0, single buffered']
    #allocation5 [shape = 's32[1]{0}', space=sflag, size = 0x4, scoped, tag = 'scoped memory for bce_bd_loss.1']
    #allocation6 [shape = 's32[1]{0}', space=sflag, size = 0x4, scoped, tag = 'scoped memory for bce_bd_loss.1']
    #allocation7 [shape = 'u8[16384]{0}', space=vmem, size = 0x4000, scoped, tag = 'input window, operand 1, single buffered']
    #allocation8 [shape = 's32[1]{0}', space=sflag, size = 0x4, scoped, tag = 'scoped memory for bce_bd_loss.1']
    #allocation9 [shape = 'u8[512]{0}', space=vmem, size = 0x400, scoped, tag = 'output window, operand 0, single buffered']
    #allocation10 [shape = 'u8[512]{0}', space=vmem, size = 0x400, scoped, tag = 'output window, operand 1, single buffered']
    #allocation11 [shape = 's32[1]{0}', space=sflag, size = 0x4, scoped, tag = 'scoped memory for bce_bd_loss.1']
    %9 = vsyncpa [#allocation5], 0
    %10 = vsyncpa [#allocation8], 0
    %11 = vsyncpa [#allocation6], 0
    %12 = vsyncpa [#allocation11], 0
    // Predicated region
    $region2: #{bce_bd_loss.1} parent=1 // pred_check
      _
    $region3: #{bce_bd_loss.1} parent=1 // pred_check_branch
      %14 = sbr.rel (0) target = $region5
    $region4: #{bce_bd_loss.1} parent=1 // pred_region
      %s15 = sadd.s32 0, 0
      %s16 = smul.u32 4, %s15
      %s18 = ssub.s32 512, 512
      %19 = vsyncadd [#allocation5], %s18
      %s20 = smul.addr %s16, 128
      %s21 = scalar_lea.hbm %s0, %s20
      %s22 = sshll.u32 [#allocation4], 4
      %s23 = int_to_ptr.vmem [resolvable:$true] %s22
      %28 = dma.hbm_to_vmem [thread:$0]  %s21, 512, %s23, [#allocation5], 128, 128, 8
    $region5: #{bce_bd_loss.1} parent=1 // pred_fallthru
      _
    // Predicated region
    $region6: #{bce_bd_loss.1} parent=1 // pred_check
      _
    $region7: #{bce_bd_loss.1} parent=1 // pred_check_branch
      %30 = sbr.rel (0) target = $region9
    $region8: #{bce_bd_loss.1} parent=1 // pred_region
      %s31 = sadd.s32 0, 0
      %s32 = smul.u32 4, %s31
      %s34 = ssub.s32 512, 512
      %35 = vsyncadd [#allocation8], %s34
      %s36 = smul.addr %s32, 128
      %s37 = scalar_lea.hbm %s1, %s36
      %s38 = sshll.u32 [#allocation7], 4
      %s39 = int_to_ptr.vmem [resolvable:$true] %s38
      %44 = dma.hbm_to_vmem [thread:$0]  %s37, 512, %s39, [#allocation8], 128, 128, 8
    $region9: #{bce_bd_loss.1} parent=1 // pred_fallthru
      _
    // Predicated region
    $region10: #{bce_bd_loss.1} parent=1 // pred_check
      _
    $region11: #{bce_bd_loss.1} parent=1 // pred_check_branch
      %46 = sbr.rel (0) target = $region13
    $region12: #{bce_bd_loss.1} parent=1 // pred_region
      %47 = dma.done [#allocation5], 512
    $region13: #{bce_bd_loss.1} parent=1 // pred_fallthru
      _
    // Predicated region
    $region14: #{bce_bd_loss.1} parent=1 // pred_check
      _
    $region15: #{bce_bd_loss.1} parent=1 // pred_check_branch
      %49 = sbr.rel (0) target = $region17
    $region16: #{bce_bd_loss.1} parent=1 // pred_region
      %50 = dma.done [#allocation8], 512
    $region17: #{bce_bd_loss.1} parent=1 // pred_fallthru
      _
    %s51 = sadd.s32 0, 0
    %s52 = smul.u32 4, %s51
    %s53 = sadd.s32 0, 0
    %s54 = smul.u32 4, %s53
    %v55 = vld [vmem:[#allocation4] sm:$0xff]
    %v56 = vld [vmem:[#allocation4 + $0x8] sm:$0xff]
    %v57 = vld [vmem:[#allocation4 + $0x10] sm:$0xff]
    %v58 = vld [vmem:[#allocation4 + $0x18] sm:$0xff]
    %v59 = vld [vmem:[#allocation7] sm:$0xff]
    %v60 = vld [vmem:[#allocation7 + $0x8] sm:$0xff]
    %v61 = vld [vmem:[#allocation7 + $0x10] sm:$0xff]
    %v62 = vld [vmem:[#allocation7 + $0x18] sm:$0xff]
    %v63 = vlog2.pop %v55
    %v64 = vmul.f32 %v63, 0.6931472
    %v65 = vlog2.pop %v56
    %v66 = vmul.f32 %v65, 0.6931472
    %v67 = vlog2.pop %v57
    %v68 = vmul.f32 %v67, 0.6931472
    %v69 = vlog2.pop %v58
    %v70 = vmul.f32 %v69, 0.6931472
    %v71 = vmax.f32 %v64, -100.0
    %v72 = vmax.f32 %v66, -100.0
    %v73 = vmax.f32 %v68, -100.0
    %v74 = vmax.f32 %v70, -100.0
    %v75 = vsub.f32 1.0, %v55
    %v76 = vsub.f32 1.0, %v56
    %v77 = vsub.f32 1.0, %v57
    %v78 = vsub.f32 1.0, %v58
    %v79 = vlog2.pop %v75
    %v80 = vmul.f32 %v79, 0.6931472
    %v81 = vlog2.pop %v76
    %v82 = vmul.f32 %v81, 0.6931472
    %v83 = vlog2.pop %v77
    %v84 = vmul.f32 %v83, 0.6931472
    %v85 = vlog2.pop %v78
    %v86 = vmul.f32 %v85, 0.6931472
    %v87 = vmax.f32 %v80, -100.0
    %v88 = vmax.f32 %v82, -100.0
    %v89 = vmax.f32 %v84, -100.0
    %v90 = vmax.f32 %v86, -100.0
    %v91 = vmul.f32 %v59, %v71
    %v92 = vmul.f32 %v60, %v72
    %v93 = vmul.f32 %v61, %v73
    %v94 = vmul.f32 %v62, %v74
    %v95 = vsub.f32 1.0, %v59
    %v96 = vsub.f32 1.0, %v60
    %v97 = vsub.f32 1.0, %v61
    %v98 = vsub.f32 1.0, %v62
    %v99 = vmul.f32 %v95, %v87
    %v100 = vmul.f32 %v96, %v88
    %v101 = vmul.f32 %v97, %v89
    %v102 = vmul.f32 %v98, %v90
    %v103 = vadd.f32 %v91, %v99
    %v104 = vadd.f32 %v92, %v100
    %v105 = vadd.f32 %v93, %v101
    %v106 = vadd.f32 %v94, %v102
    %v107 = vsub.f32 0.0, %v103
    %v108 = vsub.f32 0.0, %v104
    %v109 = vsub.f32 0.0, %v105
    %v110 = vsub.f32 0.0, %v106
    %v111 = vsub.f32 %v55, %v59
    %v112 = vsub.f32 %v56, %v60
    %v113 = vsub.f32 %v57, %v61
    %v114 = vsub.f32 %v58, %v62
    %v115 = vlaneseq
    %v116 = vshrl.u32 %v115, 7
    %v117 = vadd.s32 %v116, 8
    %v118 = vadd.s32 %v116, 16
    %v119 = vadd.s32 %v116, 24
    %vm120 = vcmp.lt.s32.totalorder %v116, 0
    %v121 = vsub.s32 0, %v116
    %v122 = vsel %vm120, %v121, %v116
    %v123 = vshrl.u32 %v122, 4
    %v124 = vand.u32 %v122, 15
    %v125 = vsub.s32 0, %v124
    %v126 = vsel %vm120, %v125, %v124
    %vm127 = vcmp.lt.s32.totalorder %v117, 0
    %v128 = vsub.s32 0, %v117
    %v129 = vsel %vm127, %v128, %v117
    %v130 = vshrl.u32 %v129, 4
    %v131 = vand.u32 %v129, 15
    %v132 = vsub.s32 0, %v131
    %v133 = vsel %vm127, %v132, %v131
    %vm134 = vcmp.lt.s32.totalorder %v118, 0
    %v135 = vsub.s32 0, %v118
    %v136 = vsel %vm134, %v135, %v118
    %v137 = vshrl.u32 %v136, 4
    %v138 = vand.u32 %v136, 15
    %v139 = vsub.s32 0, %v138
    %v140 = vsel %vm134, %v139, %v138
    %vm141 = vcmp.lt.s32.totalorder %v119, 0
    %v142 = vsub.s32 0, %v119
    %v143 = vsel %vm141, %v142, %v119
    %v144 = vshrl.u32 %v143, 4
    %v145 = vand.u32 %v143, 15
    %v146 = vsub.s32 0, %v145
    %v147 = vsel %vm141, %v146, %v145
    %vm148 = vcmp.ne.s32.totalorder %v126, 0
    %vm149 = vcmp.ne.s32.totalorder %v133, 0
    %vm150 = vcmp.ne.s32.totalorder %v140, 0
    %vm151 = vcmp.ne.s32.totalorder %v147, 0
    %vm152 = vcmp.lt.s32.totalorder %v126, 0
    %vm153 = vcmp.lt.s32.totalorder %v133, 0
    %vm154 = vcmp.lt.s32.totalorder %v140, 0
    %vm155 = vcmp.lt.s32.totalorder %v147, 0
    %vm156 = vmand %vm152, %vm148
    %vm157 = vmand %vm153, %vm149
    %vm158 = vmand %vm154, %vm150
    %vm159 = vmand %vm155, %vm151
    %v160 = vadd.s32 %v126, 16
    %v161 = vadd.s32 %v133, 16
    %v162 = vadd.s32 %v140, 16
    %v163 = vadd.s32 %v147, 16
    %v164 = vsel %vm156, %v160, %v126
    %v165 = vsel %vm157, %v161, %v133
    %v166 = vsel %vm158, %v162, %v140
    %v167 = vsel %vm159, %v163, %v147
    %v168 = vlaneseq
    %v169 = vand.u32 %v168, 127
    %vm170 = vcmp.gt.s32.totalorder %v169, 0
    %vm171 = vcmask 1047680
    %172 = vrot.lane.b32.xlu0 %v111, 16
    %v173 = vpop.permute.xlu0 %172
    %v174 = vsel %vm171, %v173, %v111
    %175 = vrot.lane.b32.xlu0 %v112, 16
    %v176 = vpop.permute.xlu0 %175
    %v177 = vsel %vm171, %v176, %v112
    %178 = vrot.lane.b32.xlu0 %v113, 16
    %v179 = vpop.permute.xlu0 %178
    %v180 = vsel %vm171, %v179, %v113
    %181 = vrot.lane.b32.xlu0 %v114, 16
    %v182 = vpop.permute.xlu0 %181
    %v183 = vsel %vm171, %v182, %v114
    %184 = vrot.lane.b32.xlu0 %v174, 16
    %v185 = vpop.permute.xlu0 %184
    %186 = vrot.lane.b32.xlu0 %v177, 16
    %v187 = vpop.permute.xlu0 %186
    %188 = vrot.lane.b32.xlu0 %v180, 16
    %v189 = vpop.permute.xlu0 %188
    %190 = vrot.lane.b32.xlu0 %v183, 16
    %v191 = vpop.permute.xlu0 %190
    %v192 = vsel %vm171, %v185, %v111
    %v193 = vsel %vm171, %v187, %v112
    %v194 = vsel %vm171, %v189, %v113
    %v195 = vsel %vm171, %v191, %v114
    %200 = vrot.lane.b32.xlu0 %v192, 113
    %v201 = vpop.permute.xlu0 %200
    %202 = vrot.lane.b32.xlu0 %v193, 113
    %v203 = vpop.permute.xlu0 %202
    %204 = vrot.lane.b32.xlu0 %v194, 113
    %v205 = vpop.permute.xlu0 %204
    %206 = vrot.lane.b32.xlu0 %v195, 113
    %v207 = vpop.permute.xlu0 %206
    %v212 = vsel %vm170, %v201, 0.0
    %v213 = vsel %vm170, %v203, 0.0
    %v214 = vsel %vm170, %v205, 0.0
    %v215 = vsel %vm170, %v207, 0.0
    %vm216 = vcmp.lt.s32.totalorder %v169, 15
    %217 = vrot.lane.b32.xlu0 %v192, 127
    %v218 = vpop.permute.xlu0 %217
    %219 = vrot.lane.b32.xlu0 %v193, 127
    %v220 = vpop.permute.xlu0 %219
    %221 = vrot.lane.b32.xlu0 %v194, 127
    %v222 = vpop.permute.xlu0 %221
    %223 = vrot.lane.b32.xlu0 %v195, 127
    %v224 = vpop.permute.xlu0 %223
    %v229 = vsel %vm216, %v218, 0.0
    %v230 = vsel %vm216, %v220, 0.0
    %v231 = vsel %vm216, %v222, 0.0
    %v232 = vsel %vm216, %v224, 0.0
    %v233 = vadd.f32 %v111, %v212
    %v234 = vadd.f32 %v112, %v213
    %v235 = vadd.f32 %v113, %v214
    %v236 = vadd.f32 %v114, %v215
    %v237 = vadd.f32 %v233, %v229
    %v238 = vadd.f32 %v234, %v230
    %v239 = vadd.f32 %v235, %v231
    %v240 = vadd.f32 %v236, %v232
    %vm241 = vcmp.gt.s32.totalorder %v164, 0
    %vm242 = vcmp.gt.s32.totalorder %v165, 0
    %vm243 = vcmp.gt.s32.totalorder %v166, 0
    %vm244 = vcmp.gt.s32.totalorder %v167, 0
    %v245 = vrot.slane %v237, 7
    %v246 = vrot.slane %v238, 7
    %v247 = vrot.slane %v239, 7
    %v248 = vrot.slane %v240, 7
    %vm249 = vcmp.lt.s32.totalorder %v116, 1
    %v250 = vsel %vm249, %v247, %v248
    %v251 = vsel %vm249, %v246, %v247
    %v252 = vsel %vm249, %v245, %v246
    %v253 = vsel %vm249, %v248, %v245
    %v254 = vsel %vm241, %v253, 0.0
    %v255 = vsel %vm242, %v252, 0.0
    %v256 = vsel %vm243, %v251, 0.0
    %v257 = vsel %vm244, %v250, 0.0
    %vm258 = vcmp.lt.s32.totalorder %v164, 15
    %vm259 = vcmp.lt.s32.totalorder %v165, 15
    %vm260 = vcmp.lt.s32.totalorder %v166, 15
    %vm261 = vcmp.lt.s32.totalorder %v167, 15
    %v262 = vrot.slane %v237, 1
    %v263 = vrot.slane %v238, 1
    %v264 = vrot.slane %v239, 1
    %v265 = vrot.slane %v240, 1
    %vm266 = vcmp.lt.s32.totalorder %v116, 7
    %v267 = vsel %vm266, %v264, %v265
    %v268 = vsel %vm266, %v263, %v264
    %v269 = vsel %vm266, %v262, %v263
    %v270 = vsel %vm266, %v265, %v262
    %v271 = vsel %vm258, %v269, 0.0
    %v272 = vsel %vm259, %v268, 0.0
    %v273 = vsel %vm260, %v267, 0.0
    %v274 = vsel %vm261, %v270, 0.0
    %v275 = vadd.f32 %v237, %v254
    %v276 = vadd.f32 %v238, %v255
    %v277 = vadd.f32 %v239, %v256
    %v278 = vadd.f32 %v240, %v257
    %v279 = vadd.f32 %v275, %v271
    %v280 = vadd.f32 %v276, %v272
    %v281 = vadd.f32 %v277, %v273
    %v282 = vadd.f32 %v278, %v274
    %v283 = vmul.f32 %v111, 9.0
    %v284 = vmul.f32 %v112, 9.0
    %v285 = vmul.f32 %v113, 9.0
    %v286 = vmul.f32 %v114, 9.0
    %v287 = vsub.f32 %v283, %v279
    %v288 = vsub.f32 %v284, %v280
    %v289 = vsub.f32 %v285, %v281
    %v290 = vsub.f32 %v286, %v282
    %v291 = vmul.f32 %v287, %v287
    %v292 = vmul.f32 %v288, %v288
    %v293 = vmul.f32 %v289, %v289
    %v294 = vmul.f32 %v290, %v290
    %p295 = scmp.eq.s32.totalorder 0, 0
    // Predicated region
    $region18: #{bce_bd_loss.1} parent=1 // pred_check
      %p296 = pneg %p295
    $region19: #{bce_bd_loss.1} parent=1 // pred_check_branch
      %298 = sbr.rel (%p296) target = $region21
    $region20: #{bce_bd_loss.1} parent=1 // pred_region
      %vm299 = vcmask 130048
      %300 = vst.msk [vmem:[#allocation2] sm:$0xff] %vm299, 0.0
      %301 = vst.msk [vmem:[#allocation2 + $0x8] sm:$0xff] %vm299, 0.0
      %302 = vst.msk [vmem:[#allocation2 + $0x10] sm:$0xff] %vm299, 0.0
      %303 = vst.msk [vmem:[#allocation2 + $0x18] sm:$0xff] %vm299, 0.0
      %304 = vst.msk [vmem:[#allocation3] sm:$0xff] %vm299, 0.0
      %305 = vst.msk [vmem:[#allocation3 + $0x8] sm:$0xff] %vm299, 0.0
      %306 = vst.msk [vmem:[#allocation3 + $0x10] sm:$0xff] %vm299, 0.0
      %307 = vst.msk [vmem:[#allocation3 + $0x18] sm:$0xff] %vm299, 0.0
    $region21: #{bce_bd_loss.1} parent=1 // pred_fallthru
      _
    %v308 = vld [vmem:[#allocation2] sm:$0xff]
    %v309 = vld [vmem:[#allocation2 + $0x8] sm:$0xff]
    %v310 = vld [vmem:[#allocation2 + $0x10] sm:$0xff]
    %v311 = vld [vmem:[#allocation2 + $0x18] sm:$0xff]
    %v312 = vadd.f32 %v308, %v107
    %v313 = vadd.f32 %v309, %v108
    %v314 = vadd.f32 %v310, %v109
    %v315 = vadd.f32 %v311, %v110
    %vm316 = vcmask 130048
    %317 = vst.msk [vmem:[#allocation2] sm:$0xff] %vm316, %v312
    %318 = vst.msk [vmem:[#allocation2 + $0x8] sm:$0xff] %vm316, %v313
    %319 = vst.msk [vmem:[#allocation2 + $0x10] sm:$0xff] %vm316, %v314
    %320 = vst.msk [vmem:[#allocation2 + $0x18] sm:$0xff] %vm316, %v315
    %v321 = vld [vmem:[#allocation3] sm:$0xff]
    %v322 = vld [vmem:[#allocation3 + $0x8] sm:$0xff]
    %v323 = vld [vmem:[#allocation3 + $0x10] sm:$0xff]
    %v324 = vld [vmem:[#allocation3 + $0x18] sm:$0xff]
    %v325 = vadd.f32 %v321, %v291
    %v326 = vadd.f32 %v322, %v292
    %v327 = vadd.f32 %v323, %v293
    %v328 = vadd.f32 %v324, %v294
    %329 = vst.msk [vmem:[#allocation3] sm:$0xff] %vm316, %v325
    %330 = vst.msk [vmem:[#allocation3 + $0x8] sm:$0xff] %vm316, %v326
    %331 = vst.msk [vmem:[#allocation3 + $0x10] sm:$0xff] %vm316, %v327
    %332 = vst.msk [vmem:[#allocation3 + $0x18] sm:$0xff] %vm316, %v328
    // Predicated region
    $region22: #{bce_bd_loss.1} parent=1 // pred_check
      %p333 = pneg %p295
    $region23: #{bce_bd_loss.1} parent=1 // pred_check_branch
      %335 = sbr.rel (%p333) target = $region25
    $region24: #{bce_bd_loss.1} parent=1 // pred_region
      %v336 = vld [vmem:[#allocation2] sm:$0xff]
      %v337 = vld [vmem:[#allocation2 + $0x8] sm:$0xff]
      %v338 = vld [vmem:[#allocation2 + $0x10] sm:$0xff]
      %v339 = vld [vmem:[#allocation2 + $0x18] sm:$0xff]
      %v340 = vsel %vm316, %v336, 0.0
      %v341 = vsel %vm316, %v337, 0.0
      %v342 = vadd.f32 %v340, %v341
      %v343 = vsel %vm316, %v338, 0.0
      %v344 = vadd.f32 %v342, %v343
      %v345 = vsel %vm316, %v339, 0.0
      %v346 = vadd.f32 %v344, %v345
      %347 = vadd.xlane.f32.xlu0 %v346
      %v348 = vpop.xlane.xlu0 %347
      %v349 = vrot.slane %v348, 4
      %v350 = vadd.f32 %v348, %v349
      %v351 = vrot.slane %v350, 2
      %v352 = vadd.f32 %v350, %v351
      %v353 = vrot.slane %v352, 1
      %v354 = vadd.f32 %v352, %v353
      %s355 = vtos %v354
      %v356 = vstv %s355
      %vm357 = vcmask 0
      %358 = vst.msk [vmem:[#allocation9] sm:$0x1] %vm357, %v356
      %v359 = vld [vmem:[#allocation3] sm:$0xff]
      %v360 = vld [vmem:[#allocation3 + $0x8] sm:$0xff]
      %v361 = vld [vmem:[#allocation3 + $0x10] sm:$0xff]
      %v362 = vld [vmem:[#allocation3 + $0x18] sm:$0xff]
      %v363 = vsel %vm316, %v359, 0.0
      %v364 = vsel %vm316, %v360, 0.0
      %v365 = vadd.f32 %v363, %v364
      %v366 = vsel %vm316, %v361, 0.0
      %v367 = vadd.f32 %v365, %v366
      %v368 = vsel %vm316, %v362, 0.0
      %v369 = vadd.f32 %v367, %v368
      %370 = vadd.xlane.f32.xlu0 %v369
      %v371 = vpop.xlane.xlu0 %370
      %v372 = vrot.slane %v371, 4
      %v373 = vadd.f32 %v371, %v372
      %v374 = vrot.slane %v373, 2
      %v375 = vadd.f32 %v373, %v374
      %v376 = vrot.slane %v375, 1
      %v377 = vadd.f32 %v375, %v376
      %s378 = vtos %v377
      %v379 = vstv %s378
      %380 = vst.msk [vmem:[#allocation10] sm:$0x1] %vm357, %v379
    $region25: #{bce_bd_loss.1} parent=1 // pred_fallthru
      _
    // Predicated region
    $region26: #{bce_bd_loss.1} parent=1 // pred_check
      _
    $region27: #{bce_bd_loss.1} parent=1 // pred_check_branch
      %382 = sbr.rel (0) target = $region29
    $region28: #{bce_bd_loss.1} parent=1 // pred_region
      %s384 = ssub.s32 16, 16
      %385 = vsyncadd [#allocation6], %s384
      %s387 = sshll.u32 [#allocation9], 4
      %s388 = int_to_ptr.vmem [resolvable:$true] %s387
      %390 = dma.vmem_to_hbm [thread:$0]  %s388, 16, %s2, [#allocation6]
    $region29: #{bce_bd_loss.1} parent=1 // pred_fallthru
      _
    // Predicated region
    $region30: #{bce_bd_loss.1} parent=1 // pred_check
      _
    $region31: #{bce_bd_loss.1} parent=1 // pred_check_branch
      %392 = sbr.rel (0) target = $region33
    $region32: #{bce_bd_loss.1} parent=1 // pred_region
      %s394 = ssub.s32 16, 16
      %395 = vsyncadd [#allocation11], %s394
      %s397 = sshll.u32 [#allocation10], 4
      %s398 = int_to_ptr.vmem [resolvable:$true] %s397
      %400 = dma.vmem_to_hbm [thread:$0]  %s398, 16, %s3, [#allocation11]
    $region33: #{bce_bd_loss.1} parent=1 // pred_fallthru
      _
    // Predicated region
    $region34: #{bce_bd_loss.1} parent=1 // pred_check
      _
    $region35: #{bce_bd_loss.1} parent=1 // pred_check_branch
      %402 = sbr.rel (0) target = $region37
    $region36: #{bce_bd_loss.1} parent=1 // pred_region
      %403 = dma.done [#allocation6], 16
    $region37: #{bce_bd_loss.1} parent=1 // pred_fallthru
      _
    // Predicated region
    $region38: #{bce_bd_loss.1} parent=1 // pred_check
      _
    $region39: #{bce_bd_loss.1} parent=1 // pred_check_branch
      %405 = sbr.rel (0) target = $region41
    $region40: #{bce_bd_loss.1} parent=1 // pred_region
      %406 = dma.done [#allocation11], 16
    $region41: #{bce_bd_loss.1} parent=1 // pred_fallthru
      _
    %407 = vsyncpa [#allocation5], 1
    %408 = vsyncpa [#allocation8], 1
    %409 = vsyncpa [#allocation6], 1
    %410 = vsyncpa [#allocation11], 1

</llo_original>
